<compile_context>
chip_gen: v6e
topology: v6e:2x2x1
jax: 0.10.0
libtpu: 0.0.40
codegen_flags: <defaults>
</compile_context>

<pallas_src>
import jax
import jax.numpy as jnp
from jax.experimental import pallas as pl
from jax.experimental.pallas import tpu as pltpu


def _round_up(x, m):
    return (x + m - 1) // m * m


# ---------------------------------------------------------------------------
# Fused path: in-kernel gather from VMEM-resident tables + score.
# ---------------------------------------------------------------------------
def _fused_gather_score_kernel(h_idx_ref, r_idx_ref, t_idx_ref, ent_ref, rel_ref,
                               o_ref, ent_f32, rel_f32):
    """Per grid step: gather one (TB,) slice of triples and score them.

    h/r/t_idx_ref : (1, TB) int32 VMEM blocks of triple indices.
    ent_ref/rel_ref: whole (E, H) / (R, H) bf16 tables, resident in VMEM.
    o_ref         : (TB, 1) f32 output block.
    ent_f32/rel_f32: f32 VMEM scratch copies of the tables (cast once at step 0).
    """
    @pl.when(pl.program_id(0) == 0)
    def _():
        # One-time on-chip upcast keeps the gather 32-bit (most robust lowering)
        # without ever writing an f32 copy of the tables back to HBM.
        ent_f32[...] = ent_ref[...].astype(jnp.float32)
        rel_f32[...] = rel_ref[...].astype(jnp.float32)

    h_idx = h_idx_ref[0, :]
    r_idx = r_idx_ref[0, :]
    t_idx = t_idx_ref[0, :]
    ent = ent_f32[...]
    rel = rel_f32[...]
    # mode="clip" also makes the zero-padded tail indices harmless.
    h_e = jnp.take(ent, h_idx, axis=0, mode="clip")
    r_e = jnp.take(rel, r_idx, axis=0, mode="clip")
    t_e = jnp.take(ent, t_idx, axis=0, mode="clip")
    o_ref[...] = -jnp.sum(h_e * r_e * t_e, axis=-1, keepdims=True)


def _pick_fused_block_rows(batch):
    # Lane-dense index blocks want TB % 128 == 0; ~1k rows keeps the gathered f32
    # intermediates (3 * TB * H * 4B) comfortably inside VMEM / vreg spill.
    return max(128, min(1024, _round_up(batch, 128)))


def fused_pointwise_score(h_idx, r_idx, t_idx, ent_emb, rel_emb, block_rows=None):
    """score = -sum(E[h] * R[r] * E[t], -1) with the embedding gather fused in."""
    B = h_idx.shape[0]
    E, H = ent_emb.shape
    R = rel_emb.shape[0]
    TB = block_rows or _pick_fused_block_rows(B)
    TB = max(128, int(TB) // 128 * 128)
    B_pad = _round_up(B, TB)

    def prep(ix):
        ix = ix.astype(jnp.int32).reshape(1, B)
        if B_pad != B:
            # Padding the int32 index row costs ~4 B/row (vs padding the (B, H)
            # embeddings in the old version); padded rows gather row 0 and their
            # scores are sliced off below.
            ix = jnp.pad(ix, ((0, 0), (0, B_pad - B)))
        return ix

    idx_spec = pl.BlockSpec((1, TB), lambda i: (0, i))
    table_spec = pl.BlockSpec(memory_space=pltpu.MemorySpace.VMEM)  # whole array, resident

    out = pl.pallas_call(
        _fused_gather_score_kernel,
        out_shape=jax.ShapeDtypeStruct((B_pad, 1), jnp.float32),
        grid=(B_pad // TB,),
        in_specs=[idx_spec, idx_spec, idx_spec, table_spec, table_spec],
        out_specs=pl.BlockSpec((TB, 1), lambda i: (i, 0)),
        scratch_shapes=[pltpu.VMEM((E, H), jnp.float32),
                        pltpu.VMEM((R, H), jnp.float32)],
        # "arbitrary": step 0 initializes the f32 table scratch that later steps
        # reuse, so grid iterations must stay in order on one core.
        compiler_params=pltpu.CompilerParams(dimension_semantics=("arbitrary",)),
    )(prep(h_idx), prep(r_idx), prep(t_idx), ent_emb, rel_emb)
    return out[:B, 0]


# ---------------------------------------------------------------------------
# Streaming fallback: pre-gathered (B, H) embeddings -> scores.
# ---------------------------------------------------------------------------
def _streaming_score_kernel(h_ref, r_ref, t_ref, o_ref):
    # (TB, H) bf16 tiles; cast after load (no bf16 VPU on v5e), f32 accumulate.
    h = h_ref[...].astype(jnp.float32)
    r = r_ref[...].astype(jnp.float32)
    t = t_ref[...].astype(jnp.float32)
    o_ref[...] = -jnp.sum(h * r * t, axis=-1, keepdims=True)


def _pick_streaming_block_rows(batch, hidden, itemsize,
                               vmem_budget_bytes=12 * 1024 * 1024):
    """Largest batch tile (multiple of 16) whose double-buffered footprint fits.

    12 MiB stays inside v5e's 16 MiB scoped default without touching
    vmem_limit_bytes; at H=128 bf16 it yields TB=8192 (old cap was 2048), so the
    ~3 MiB per-step payload amortizes the ~0.35 us grid-step overhead on every
    generation, including v7x's faster HBM.
    """
    per_row = 3 * 2 * hidden * itemsize + 2 * 4   # 3 inputs x 2 buffers + f32 out
    tb = min(vmem_budget_bytes // max(per_row, 1), 8192)
    tb = min(tb, _round_up(batch, 16))            # never wildly exceed the batch
    return max(16, int(tb) // 16 * 16)            # bf16 sublane pack = 16 rows


def streaming_pointwise_score(h_e, r_e, t_e, block_rows=None):
    """Two-pass path: gather done by XLA, Pallas streams the multiply-reduce."""
    assert h_e.shape == r_e.shape == t_e.shape and h_e.ndim == 2
    B, H = h_e.shape
    TB = block_rows or _pick_streaming_block_rows(B, H, h_e.dtype.itemsize)
    TB = max(16, int(TB) // 16 * 16)
    emb_spec = pl.BlockSpec((TB, H), lambda i: (i, 0))
    out = pl.pallas_call(
        _streaming_score_kernel,
        out_shape=jax.ShapeDtypeStruct((B, 1), jnp.float32),
        # No jnp.pad of the (B, H) inputs: the ragged last block is boundary-masked
        # by Pallas, so garbage tail rows are computed but never written back.
        grid=(pl.cdiv(B, TB),),
        in_specs=[emb_spec, emb_spec, emb_spec],
        out_specs=pl.BlockSpec((TB, 1), lambda i: (i, 0)),
        compiler_params=pltpu.CompilerParams(dimension_semantics=("parallel",)),
    )(h_e, r_e, t_e)
    return out[:, 0]


# ---------------------------------------------------------------------------
# Concrete pointwise KGE model (DistMult-style scoring).
# ---------------------------------------------------------------------------
class PointwiseModelJAX:
    # bf16 resident input (2 B) + f32 scratch copy (4 B) = 6 B per table element
    # must fit this budget for the fused path (headroom left for index/output
    # blocks, gathered intermediates and internal scratch).
    _FUSED_TABLE_BUDGET_BYTES = 4 * 1024 * 1024

    def __init__(self, model_name, num_entities, num_relations, hidden, key):
        self.model_name = model_name
        self.database = {}
        k_ent, k_rel = jax.random.split(key)
        bound = 6.0 / jnp.sqrt(hidden)
        # bf16 storage halves both the resident-table VMEM and the fallback-path
        # gather traffic vs f32.
        self.ent_embeddings = jax.random.uniform(
            k_ent, (num_entities, hidden), jnp.float32, -bound, bound
        ).astype(jnp.bfloat16)
        self.rel_embeddings = jax.random.uniform(
            k_rel, (num_relations, hidden), jnp.float32, -bound, bound
        ).astype(jnp.bfloat16)
        table_elems = self.ent_embeddings.size + self.rel_embeddings.size
        self._tables_fit_vmem = table_elems * 6 <= self._FUSED_TABLE_BUDGET_BYTES
        self._fused_ok = None   # tri-state: unknown / works / lowering failed

    def embed(self, h, r, t):
        h_e = jnp.take(self.ent_embeddings, h, axis=0)
        r_e = jnp.take(self.rel_embeddings, r, axis=0)
        t_e = jnp.take(self.ent_embeddings, t, axis=0)
        return h_e, r_e, t_e

    def forward(self, h, r, t, block_rows=None):
        if self._tables_fit_vmem and self._fused_ok is not False:
            try:
                out = fused_pointwise_score(h, r, t, self.ent_embeddings,
                                            self.rel_embeddings, block_rows)
                if self._fused_ok is None:
                    # First call only: force compile/execute inside the try so any
                    # lowering problem triggers the fallback instead of crashing.
                    jax.block_until_ready(out)
                self._fused_ok = True
                return out
            except Exception:
                self._fused_ok = False   # fall through to the streaming kernel
        h_e, r_e, t_e = self.embed(h, r, t)
        return streaming_pointwise_score(h_e, r_e, t_e, block_rows=block_rows)

    def load_params(self, param_list, kwargs):
        for param_name in param_list:
            if param_name not in kwargs:
                raise Exception('hyperparameter %s not found!' % param_name)
            self.database[param_name] = kwargs[param_name]
        return self.database


if __name__ == "__main__":
    key = jax.random.PRNGKey(0)
    k_model, k_h, k_r, k_t = jax.random.split(key, 4)

    # hidden = 128 (lane-width multiple); batch deliberately not a multiple of any
    # tile so both the fused index-padding path and the streaming ragged-last-block
    # path are exercised.
    num_entities, num_relations, hidden, batch = 50, 10, 128, 200
    model = PointwiseModelJAX("pointwise_distmult", num_entities,
                              num_relations, hidden, k_model)

    h_idx = jax.random.randint(k_h, (batch,), 0, num_entities)
    r_idx = jax.random.randint(k_r, (batch,), 0, num_relations)
    t_idx = jax.random.randint(k_t, (batch,), 0, num_entities)

    # Pure-JAX reference (same bf16 params, f32 math).
    h_e, r_e, t_e = model.embed(h_idx, r_idx, t_idx)
    ref = -jnp.sum(h_e.astype(jnp.float32) * r_e.astype(jnp.float32)
                   * t_e.astype(jnp.float32), axis=-1)

    # Primary path (fused in-kernel gather; auto-falls back if unsupported).
    scores = model.forward(h_idx, r_idx, t_idx)
    jax.block_until_ready(scores)
    assert scores.shape == (batch,)
    assert jnp.allclose(scores, ref, atol=1e-4, rtol=1e-4)

    # Also validate the streaming fallback kernel explicitly (ragged last block).
    scores_stream = streaming_pointwise_score(h_e, r_e, t_e)
    jax.block_until_ready(scores_stream)
    assert scores_stream.shape == (batch,)
    assert jnp.allclose(scores_stream, ref, atol=1e-4, rtol=1e-4)

    print("KERNEL_OK")
</pallas_src>

<mosaic_0001>
module attributes {stable_mosaic.version = 11 : i64} {
  func.func @_streaming_score_kernel(%arg0: i32, %arg1: memref<208x128xbf16, #tpu.memory_space<vmem>>, %arg2: memref<208x128xbf16, #tpu.memory_space<vmem>>, %arg3: memref<208x128xbf16, #tpu.memory_space<vmem>>, %arg4: memref<208x1xf32, #tpu.memory_space<vmem>>) attributes {dimension_semantics = [#tpu.dimension_semantics<parallel>], iteration_bounds = array<i64: 1>, scalar_prefetch = 0 : i64, scratch_operands = 0 : i64, tpu.core_type = #tpu.core_type<tc>, window_params = [{transform_indices = @transform_0, window_bounds = array<i64: 208, 128>}, {transform_indices = @transform_1, window_bounds = array<i64: 208, 128>}, {transform_indices = @transform_2, window_bounds = array<i64: 208, 128>}, {transform_indices = @transform_3, window_bounds = array<i64: 208, 1>}]} {
    %c0 = arith.constant 0 : index
    %c0_0 = arith.constant 0 : index
    %0 = vector.load %arg1[%c0, %c0_0] : memref<208x128xbf16, #tpu.memory_space<vmem>>, vector<208x128xbf16>
    %1 = arith.extf %0 : vector<208x128xbf16> to vector<208x128xf32>
    %c0_1 = arith.constant 0 : index
    %c0_2 = arith.constant 0 : index
    %2 = vector.load %arg2[%c0_1, %c0_2] : memref<208x128xbf16, #tpu.memory_space<vmem>>, vector<208x128xbf16>
    %3 = arith.extf %2 : vector<208x128xbf16> to vector<208x128xf32>
    %c0_3 = arith.constant 0 : index
    %c0_4 = arith.constant 0 : index
    %4 = vector.load %arg3[%c0_3, %c0_4] : memref<208x128xbf16, #tpu.memory_space<vmem>>, vector<208x128xbf16>
    %5 = arith.extf %4 : vector<208x128xbf16> to vector<208x128xf32>
    %6 = arith.mulf %1, %3 : vector<208x128xf32>
    %7 = arith.mulf %6, %5 : vector<208x128xf32>
    %cst = arith.constant dense<0.000000e+00> : vector<208xf32>
    %8 = vector.multi_reduction <add>, %7, %cst [1] : vector<208x128xf32> to vector<208xf32>
    %9 = vector.shape_cast %8 : vector<208xf32> to vector<208x1xf32>
    %cst_5 = arith.constant 0.000000e+00 : f32
    %10 = vector.broadcast %cst_5 : f32 to vector<208x1xf32>
    %11 = arith.subf %10, %9 : vector<208x1xf32>
    %c0_6 = arith.constant 0 : index
    %c0_7 = arith.constant 0 : index
    %12 = vector.load %arg4[%c0_6, %c0_7] : memref<208x1xf32, #tpu.memory_space<vmem>>, vector<208x1xf32>
    tpu.vector_store %arg4[%c0_6, %c0_7], %11 {strides = array<i32>} : memref<208x1xf32, #tpu.memory_space<vmem>>, vector<208x1xf32>,
    return
  }
  func.func @transform_0(%arg0: i32) -> (i32, i32) {
    %c0_i32 = arith.constant 0 : i32
    %c0_i32_0 = arith.constant 0 : i32
    return %arg0, %c0_i32 : i32, i32
  }
  func.func @transform_1(%arg0: i32) -> (i32, i32) {
    %c0_i32 = arith.constant 0 : i32
    %c0_i32_0 = arith.constant 0 : i32
    return %arg0, %c0_i32 : i32, i32
  }
  func.func @transform_2(%arg0: i32) -> (i32, i32) {
    %c0_i32 = arith.constant 0 : i32
    %c0_i32_0 = arith.constant 0 : i32
    return %arg0, %c0_i32 : i32, i32
  }
  func.func @transform_3(%arg0: i32) -> (i32, i32) {
    %c0_i32 = arith.constant 0 : i32
    %c0_i32_0 = arith.constant 0 : i32
    return %arg0, %c0_i32 : i32, i32
  }
}

</mosaic_0001>

<llo_original>
// kernel: tpu_custom_call.1
$region0: #{tpu_custom_call.1}
  #allocation0 [shape = 'u32[]', space=smem, size = 0x4, offset = 0x4, fixed_abs, tag = 'smem constant byte address 0x4 - core index']
  #allocation1 [shape = 'u32[144,128]{1,0:T(1,128)}', space=vmem, size = 0x12000, scoped, tag = 'internal scratch']
  %s0 = inlined_call_operand.hbm [shape: bf16[200,128], index: 0, kind: input, shape index: {}]
  %s1 = inlined_call_operand.hbm [shape: bf16[200,128], index: 1, kind: input, shape index: {}]
  %s2 = inlined_call_operand.hbm [shape: bf16[200,128], index: 2, kind: input, shape index: {}]
  %s3 = inlined_call_operand.vmem [shape: f32[200,1], index: 3, kind: output, shape index: {}]
  %s4 = sld [smem:[#allocation0]]
  $region68: #{tpu_custom_call.1} parent=0
    _
  %s6 = ssub.s32 1, %s4
  %s7 = scalar_select 0, %s6, %s4
  $region1: #{tpu_custom_call.1} parent=0
    #allocation2 [shape = 'u8[53248]{0}', space=vmem, size = 0xd000, scoped, tag = 'input window, operand 0, single buffered']
    #allocation3 [shape = 's32[1]{0}', space=sflag, size = 0x4, scoped, tag = 'scoped memory for tpu_custom_call.1']
    #allocation4 [shape = 'u8[53248]{0}', space=vmem, size = 0xd000, scoped, tag = 'input window, operand 1, single buffered']
    #allocation5 [shape = 's32[1]{0}', space=sflag, size = 0x4, scoped, tag = 'scoped memory for tpu_custom_call.1']
    #allocation6 [shape = 'u8[53248]{0}', space=vmem, size = 0xd000, scoped, tag = 'input window, operand 2, single buffered']
    #allocation7 [shape = 'u8[106496]{0}', space=vmem, size = 0x1a000, scoped, tag = 'output window, operand 0, single buffered']
    %8 = vsyncpa [#allocation3], 0
    %9 = vsyncpa [#allocation5], 0
    // Predicated region
    $region2: #{tpu_custom_call.1} parent=1 // pred_check
      _
    $region3: #{tpu_custom_call.1} parent=1 // pred_check_branch
      %11 = sbr.rel (0) target = $region5
    $region4: #{tpu_custom_call.1} parent=1 // pred_region
      %s13 = ssub.s32 1664, 1600
      %14 = vsyncadd [#allocation3], %s13
      %s15 = sshll.u32 [#allocation2], 4
      %s16 = int_to_ptr.vmem [resolvable:$true] %s15
      %21 = dma.hbm_to_vmem [thread:$0]  %s0, 1600, %s16, [#allocation3], 64, 64, 4
    $region5: #{tpu_custom_call.1} parent=1 // pred_fallthru
      _
    // Predicated region
    $region6: #{tpu_custom_call.1} parent=1 // pred_check
      _
    $region7: #{tpu_custom_call.1} parent=1 // pred_check_branch
      %23 = sbr.rel (0) target = $region9
    $region8: #{tpu_custom_call.1} parent=1 // pred_region
      %s25 = ssub.s32 1664, 1600
      %26 = vsyncadd [#allocation5], %s25
      %s27 = sshll.u32 [#allocation4], 4
      %s28 = int_to_ptr.vmem [resolvable:$true] %s27
      %33 = dma.hbm_to_vmem [thread:$0]  %s1, 1600, %s28, [#allocation5], 64, 64, 4
    $region9: #{tpu_custom_call.1} parent=1 // pred_fallthru
      _
    // Predicated region
    $region10: #{tpu_custom_call.1} parent=1 // pred_check
      _
    $region11: #{tpu_custom_call.1} parent=1 // pred_check_branch
      %35 = sbr.rel (0) target = $region13
    $region12: #{tpu_custom_call.1} parent=1 // pred_region
      %s37 = ssub.s32 1664, 1600
      %38 = vsyncadd [#allocation5], %s37
      %s39 = sshll.u32 [#allocation6], 4
      %s40 = int_to_ptr.vmem [resolvable:$true] %s39
      %45 = dma.hbm_to_vmem [thread:$0]  %s2, 1600, %s40, [#allocation5], 64, 64, 4
    $region13: #{tpu_custom_call.1} parent=1 // pred_fallthru
      _
    // Predicated region
    $region14: #{tpu_custom_call.1} parent=1 // pred_check
      _
    $region15: #{tpu_custom_call.1} parent=1 // pred_check_branch
      %47 = sbr.rel (0) target = $region17
    $region16: #{tpu_custom_call.1} parent=1 // pred_region
      %48 = dma.done [#allocation3], 1664
    $region17: #{tpu_custom_call.1} parent=1 // pred_fallthru
      _
    // Predicated region
    $region18: #{tpu_custom_call.1} parent=1 // pred_check
      _
    $region19: #{tpu_custom_call.1} parent=1 // pred_check_branch
      %50 = sbr.rel (0) target = $region21
    $region20: #{tpu_custom_call.1} parent=1 // pred_region
      %51 = dma.done [#allocation5], 1664
    $region21: #{tpu_custom_call.1} parent=1 // pred_fallthru
      _
    // Predicated region
    $region22: #{tpu_custom_call.1} parent=1 // pred_check
      _
    $region23: #{tpu_custom_call.1} parent=1 // pred_check_branch
      %53 = sbr.rel (0) target = $region25
    $region24: #{tpu_custom_call.1} parent=1 // pred_region
      %54 = dma.done [#allocation5], 1664
    $region25: #{tpu_custom_call.1} parent=1 // pred_fallthru
      _
    %v55 = vld [vmem:[#allocation2] sm:$0xf]
    %v56 = vld [vmem:[#allocation2 + $0x4] sm:$0xf]
    %v57 = vld [vmem:[#allocation2 + $0x8] sm:$0xf]
    %v58 = vld [vmem:[#allocation2 + $0xc] sm:$0xf]
    %v59 = vld [vmem:[#allocation2 + $0x10] sm:$0xf]
    %v60 = vld [vmem:[#allocation2 + $0x14] sm:$0xf]
    %v61 = vld [vmem:[#allocation2 + $0x18] sm:$0xf]
    %v62 = vld [vmem:[#allocation2 + $0x1c] sm:$0xf]
    %v63 = vld [vmem:[#allocation2 + $0x20] sm:$0xf]
    %v64 = vld [vmem:[#allocation2 + $0x24] sm:$0xf]
    %v65 = vld [vmem:[#allocation2 + $0x28] sm:$0xf]
    %v66 = vld [vmem:[#allocation2 + $0x2c] sm:$0xf]
    %v67 = vld [vmem:[#allocation2 + $0x30] sm:$0xf]
    %v68 = vld [vmem:[#allocation2 + $0x34] sm:$0xf]
    %v69 = vld [vmem:[#allocation2 + $0x38] sm:$0xf]
    %v70 = vld [vmem:[#allocation2 + $0x3c] sm:$0xf]
    %v71 = vld [vmem:[#allocation2 + $0x40] sm:$0xf]
    %v72 = vld [vmem:[#allocation2 + $0x44] sm:$0xf]
    %v73 = vld [vmem:[#allocation2 + $0x48] sm:$0xf]
    %v74 = vld [vmem:[#allocation2 + $0x4c] sm:$0xf]
    %v75 = vld [vmem:[#allocation2 + $0x50] sm:$0xf]
    %v76 = vld [vmem:[#allocation2 + $0x54] sm:$0xf]
    %v77 = vld [vmem:[#allocation2 + $0x58] sm:$0xf]
    %v78 = vld [vmem:[#allocation2 + $0x5c] sm:$0xf]
    %v79 = vld [vmem:[#allocation2 + $0x60] sm:$0xf]
    %v80 = vld [vmem:[#allocation2 + $0x64] sm:$0xf]
    %v81 = vunpack.c.l.bf16 %v55
    %v82 = vunpack.c.l.bf16 %v56
    %v83 = vunpack.c.l.bf16 %v57
    %v84 = vunpack.c.l.bf16 %v58
    %v85 = vunpack.c.l.bf16 %v59
    %v86 = vunpack.c.l.bf16 %v60
    %v87 = vunpack.c.l.bf16 %v61
    %v88 = vunpack.c.l.bf16 %v62
    %v89 = vunpack.c.l.bf16 %v63
    %v90 = vunpack.c.l.bf16 %v64
    %v91 = vunpack.c.l.bf16 %v65
    %v92 = vunpack.c.l.bf16 %v66
    %v93 = vunpack.c.l.bf16 %v67
    %v94 = vunpack.c.l.bf16 %v68
    %v95 = vunpack.c.l.bf16 %v69
    %v96 = vunpack.c.l.bf16 %v70
    %v97 = vunpack.c.l.bf16 %v71
    %v98 = vunpack.c.l.bf16 %v72
    %v99 = vunpack.c.l.bf16 %v73
    %v100 = vunpack.c.l.bf16 %v74
    %v101 = vunpack.c.l.bf16 %v75
    %v102 = vunpack.c.l.bf16 %v76
    %v103 = vunpack.c.l.bf16 %v77
    %v104 = vunpack.c.l.bf16 %v78
    %v105 = vunpack.c.l.bf16 %v79
    %v106 = vunpack.c.l.bf16 %v80
    %v107 = vld [vmem:[#allocation4] sm:$0xf]
    %v108 = vld [vmem:[#allocation4 + $0x4] sm:$0xf]
    %v109 = vld [vmem:[#allocation4 + $0x8] sm:$0xf]
    %v110 = vld [vmem:[#allocation4 + $0xc] sm:$0xf]
    %v111 = vld [vmem:[#allocation4 + $0x10] sm:$0xf]
    %v112 = vld [vmem:[#allocation4 + $0x14] sm:$0xf]
    %v113 = vld [vmem:[#allocation4 + $0x18] sm:$0xf]
    %v114 = vld [vmem:[#allocation4 + $0x1c] sm:$0xf]
    %v115 = vld [vmem:[#allocation4 + $0x20] sm:$0xf]
    %v116 = vld [vmem:[#allocation4 + $0x24] sm:$0xf]
    %v117 = vld [vmem:[#allocation4 + $0x28] sm:$0xf]
    %v118 = vld [vmem:[#allocation4 + $0x2c] sm:$0xf]
    %v119 = vld [vmem:[#allocation4 + $0x30] sm:$0xf]
    %v120 = vld [vmem:[#allocation4 + $0x34] sm:$0xf]
    %v121 = vld [vmem:[#allocation4 + $0x38] sm:$0xf]
    %v122 = vld [vmem:[#allocation4 + $0x3c] sm:$0xf]
    %v123 = vld [vmem:[#allocation4 + $0x40] sm:$0xf]
    %v124 = vld [vmem:[#allocation4 + $0x44] sm:$0xf]
    %v125 = vld [vmem:[#allocation4 + $0x48] sm:$0xf]
    %v126 = vld [vmem:[#allocation4 + $0x4c] sm:$0xf]
    %v127 = vld [vmem:[#allocation4 + $0x50] sm:$0xf]
    %v128 = vld [vmem:[#allocation4 + $0x54] sm:$0xf]
    %v129 = vld [vmem:[#allocation4 + $0x58] sm:$0xf]
    %v130 = vld [vmem:[#allocation4 + $0x5c] sm:$0xf]
    %v131 = vld [vmem:[#allocation4 + $0x60] sm:$0xf]
    %v132 = vld [vmem:[#allocation4 + $0x64] sm:$0xf]
    %v133 = vunpack.c.l.bf16 %v107
    %v134 = vunpack.c.l.bf16 %v108
    %v135 = vunpack.c.l.bf16 %v109
    %v136 = vunpack.c.l.bf16 %v110
    %v137 = vunpack.c.l.bf16 %v111
    %v138 = vunpack.c.l.bf16 %v112
    %v139 = vunpack.c.l.bf16 %v113
    %v140 = vunpack.c.l.bf16 %v114
    %v141 = vunpack.c.l.bf16 %v115
    %v142 = vunpack.c.l.bf16 %v116
    %v143 = vunpack.c.l.bf16 %v117
    %v144 = vunpack.c.l.bf16 %v118
    %v145 = vunpack.c.l.bf16 %v119
    %v146 = vunpack.c.l.bf16 %v120
    %v147 = vunpack.c.l.bf16 %v121
    %v148 = vunpack.c.l.bf16 %v122
    %v149 = vunpack.c.l.bf16 %v123
    %v150 = vunpack.c.l.bf16 %v124
    %v151 = vunpack.c.l.bf16 %v125
    %v152 = vunpack.c.l.bf16 %v126
    %v153 = vunpack.c.l.bf16 %v127
    %v154 = vunpack.c.l.bf16 %v128
    %v155 = vunpack.c.l.bf16 %v129
    %v156 = vunpack.c.l.bf16 %v130
    %v157 = vunpack.c.l.bf16 %v131
    %v158 = vunpack.c.l.bf16 %v132
    %v159 = vld [vmem:[#allocation6] sm:$0xf]
    %v160 = vld [vmem:[#allocation6 + $0x4] sm:$0xf]
    %v161 = vld [vmem:[#allocation6 + $0x8] sm:$0xf]
    %v162 = vld [vmem:[#allocation6 + $0xc] sm:$0xf]
    %v163 = vld [vmem:[#allocation6 + $0x10] sm:$0xf]
    %v164 = vld [vmem:[#allocation6 + $0x14] sm:$0xf]
    %v165 = vld [vmem:[#allocation6 + $0x18] sm:$0xf]
    %v166 = vld [vmem:[#allocation6 + $0x1c] sm:$0xf]
    %v167 = vld [vmem:[#allocation6 + $0x20] sm:$0xf]
    %v168 = vld [vmem:[#allocation6 + $0x24] sm:$0xf]
    %v169 = vld [vmem:[#allocation6 + $0x28] sm:$0xf]
    %v170 = vld [vmem:[#allocation6 + $0x2c] sm:$0xf]
    %v171 = vld [vmem:[#allocation6 + $0x30] sm:$0xf]
    %v172 = vld [vmem:[#allocation6 + $0x34] sm:$0xf]
    %v173 = vld [vmem:[#allocation6 + $0x38] sm:$0xf]
    %v174 = vld [vmem:[#allocation6 + $0x3c] sm:$0xf]
    %v175 = vld [vmem:[#allocation6 + $0x40] sm:$0xf]
    %v176 = vld [vmem:[#allocation6 + $0x44] sm:$0xf]
    %v177 = vld [vmem:[#allocation6 + $0x48] sm:$0xf]
    %v178 = vld [vmem:[#allocation6 + $0x4c] sm:$0xf]
    %v179 = vld [vmem:[#allocation6 + $0x50] sm:$0xf]
    %v180 = vld [vmem:[#allocation6 + $0x54] sm:$0xf]
    %v181 = vld [vmem:[#allocation6 + $0x58] sm:$0xf]
    %v182 = vld [vmem:[#allocation6 + $0x5c] sm:$0xf]
    %v183 = vld [vmem:[#allocation6 + $0x60] sm:$0xf]
    %v184 = vld [vmem:[#allocation6 + $0x64] sm:$0xf]
    %v185 = vunpack.c.l.bf16 %v159
    %v186 = vunpack.c.l.bf16 %v160
    %v187 = vunpack.c.l.bf16 %v161
    %v188 = vunpack.c.l.bf16 %v162
    %v189 = vunpack.c.l.bf16 %v163
    %v190 = vunpack.c.l.bf16 %v164
    %v191 = vunpack.c.l.bf16 %v165
    %v192 = vunpack.c.l.bf16 %v166
    %v193 = vunpack.c.l.bf16 %v167
    %v194 = vunpack.c.l.bf16 %v168
    %v195 = vunpack.c.l.bf16 %v169
    %v196 = vunpack.c.l.bf16 %v170
    %v197 = vunpack.c.l.bf16 %v171
    %v198 = vunpack.c.l.bf16 %v172
    %v199 = vunpack.c.l.bf16 %v173
    %v200 = vunpack.c.l.bf16 %v174
    %v201 = vunpack.c.l.bf16 %v175
    %v202 = vunpack.c.l.bf16 %v176
    %v203 = vunpack.c.l.bf16 %v177
    %v204 = vunpack.c.l.bf16 %v178
    %v205 = vunpack.c.l.bf16 %v179
    %v206 = vunpack.c.l.bf16 %v180
    %v207 = vunpack.c.l.bf16 %v181
    %v208 = vunpack.c.l.bf16 %v182
    %v209 = vunpack.c.l.bf16 %v183
    %v210 = vunpack.c.l.bf16 %v184
    %v211 = vmul.f32 %v81, %v133
    %v212 = vmul.f32 %v82, %v134
    %v213 = vmul.f32 %v83, %v135
    %v214 = vmul.f32 %v84, %v136
    %v215 = vmul.f32 %v85, %v137
    %v216 = vmul.f32 %v86, %v138
    %v217 = vmul.f32 %v87, %v139
    %v218 = vmul.f32 %v88, %v140
    %v219 = vmul.f32 %v89, %v141
    %v220 = vmul.f32 %v90, %v142
    %v221 = vmul.f32 %v91, %v143
    %v222 = vmul.f32 %v92, %v144
    %v223 = vmul.f32 %v93, %v145
    %v224 = vmul.f32 %v94, %v146
    %v225 = vmul.f32 %v95, %v147
    %v226 = vmul.f32 %v96, %v148
    %v227 = vmul.f32 %v97, %v149
    %v228 = vmul.f32 %v98, %v150
    %v229 = vmul.f32 %v99, %v151
    %v230 = vmul.f32 %v100, %v152
    %v231 = vmul.f32 %v101, %v153
    %v232 = vmul.f32 %v102, %v154
    %v233 = vmul.f32 %v103, %v155
    %v234 = vmul.f32 %v104, %v156
    %v235 = vmul.f32 %v105, %v157
    %v236 = vmul.f32 %v106, %v158
    %v237 = vmul.f32 %v211, %v185
    %v238 = vmul.f32 %v212, %v186
    %v239 = vmul.f32 %v213, %v187
    %v240 = vmul.f32 %v214, %v188
    %v241 = vmul.f32 %v215, %v189
    %v242 = vmul.f32 %v216, %v190
    %v243 = vmul.f32 %v217, %v191
    %v244 = vmul.f32 %v218, %v192
    %v245 = vmul.f32 %v219, %v193
    %v246 = vmul.f32 %v220, %v194
    %v247 = vmul.f32 %v221, %v195
    %v248 = vmul.f32 %v222, %v196
    %v249 = vmul.f32 %v223, %v197
    %v250 = vmul.f32 %v224, %v198
    %v251 = vmul.f32 %v225, %v199
    %v252 = vmul.f32 %v226, %v200
    %v253 = vmul.f32 %v227, %v201
    %v254 = vmul.f32 %v228, %v202
    %v255 = vmul.f32 %v229, %v203
    %v256 = vmul.f32 %v230, %v204
    %v257 = vmul.f32 %v231, %v205
    %v258 = vmul.f32 %v232, %v206
    %v259 = vmul.f32 %v233, %v207
    %v260 = vmul.f32 %v234, %v208
    %v261 = vmul.f32 %v235, %v209
    %v262 = vmul.f32 %v236, %v210
    %263 = vadd.xlane.f32.xlu0 %v237
    %v264 = vpop.xlane.xlu0 %263
    %265 = vadd.xlane.f32.xlu0 %v238
    %v266 = vpop.xlane.xlu0 %265
    %267 = vadd.xlane.f32.xlu0 %v239
    %v268 = vpop.xlane.xlu0 %267
    %269 = vadd.xlane.f32.xlu0 %v240
    %v270 = vpop.xlane.xlu0 %269
    %271 = vadd.xlane.f32.xlu0 %v241
    %v272 = vpop.xlane.xlu0 %271
    %273 = vadd.xlane.f32.xlu0 %v242
    %v274 = vpop.xlane.xlu0 %273
    %275 = vadd.xlane.f32.xlu0 %v243
    %v276 = vpop.xlane.xlu0 %275
    %277 = vadd.xlane.f32.xlu0 %v244
    %v278 = vpop.xlane.xlu0 %277
    %279 = vadd.xlane.f32.xlu0 %v245
    %v280 = vpop.xlane.xlu0 %279
    %281 = vadd.xlane.f32.xlu0 %v246
    %v282 = vpop.xlane.xlu0 %281
    %283 = vadd.xlane.f32.xlu0 %v247
    %v284 = vpop.xlane.xlu0 %283
    %285 = vadd.xlane.f32.xlu0 %v248
    %v286 = vpop.xlane.xlu0 %285
    %287 = vadd.xlane.f32.xlu0 %v249
    %v288 = vpop.xlane.xlu0 %287
    %289 = vadd.xlane.f32.xlu0 %v250
    %v290 = vpop.xlane.xlu0 %289
    %291 = vadd.xlane.f32.xlu0 %v251
    %v292 = vpop.xlane.xlu0 %291
    %293 = vadd.xlane.f32.xlu0 %v252
    %v294 = vpop.xlane.xlu0 %293
    %295 = vadd.xlane.f32.xlu0 %v253
    %v296 = vpop.xlane.xlu0 %295
    %297 = vadd.xlane.f32.xlu0 %v254
    %v298 = vpop.xlane.xlu0 %297
    %299 = vadd.xlane.f32.xlu0 %v255
    %v300 = vpop.xlane.xlu0 %299
    %301 = vadd.xlane.f32.xlu0 %v256
    %v302 = vpop.xlane.xlu0 %301
    %303 = vadd.xlane.f32.xlu0 %v257
    %v304 = vpop.xlane.xlu0 %303
    %305 = vadd.xlane.f32.xlu0 %v258
    %v306 = vpop.xlane.xlu0 %305
    %307 = vadd.xlane.f32.xlu0 %v259
    %v308 = vpop.xlane.xlu0 %307
    %309 = vadd.xlane.f32.xlu0 %v260
    %v310 = vpop.xlane.xlu0 %309
    %311 = vadd.xlane.f32.xlu0 %v261
    %v312 = vpop.xlane.xlu0 %311
    %313 = vadd.xlane.f32.xlu0 %v262
    %v314 = vpop.xlane.xlu0 %313
    %v315 = vsub.f32 0.0, %v264
    %v316 = vsub.f32 0.0, %v266
    %v317 = vsub.f32 0.0, %v268
    %v318 = vsub.f32 0.0, %v270
    %v319 = vsub.f32 0.0, %v272
    %v320 = vsub.f32 0.0, %v274
    %v321 = vsub.f32 0.0, %v276
    %v322 = vsub.f32 0.0, %v278
    %v323 = vsub.f32 0.0, %v280
    %v324 = vsub.f32 0.0, %v282
    %v325 = vsub.f32 0.0, %v284
    %v326 = vsub.f32 0.0, %v286
    %v327 = vsub.f32 0.0, %v288
    %v328 = vsub.f32 0.0, %v290
    %v329 = vsub.f32 0.0, %v292
    %v330 = vsub.f32 0.0, %v294
    %v331 = vsub.f32 0.0, %v296
    %v332 = vsub.f32 0.0, %v298
    %v333 = vsub.f32 0.0, %v300
    %v334 = vsub.f32 0.0, %v302
    %v335 = vsub.f32 0.0, %v304
    %v336 = vsub.f32 0.0, %v306
    %v337 = vsub.f32 0.0, %v308
    %v338 = vsub.f32 0.0, %v310
    %v339 = vsub.f32 0.0, %v312
    %v340 = vsub.f32 0.0, %v314
    %vm341 = vcmask 7168
    %342 = vst.msk [vmem:[#allocation7] sm:$0xff] %vm341, %v315
    %343 = vst.msk [vmem:[#allocation7 + $0x8] sm:$0xff] %vm341, %v316
    %344 = vst.msk [vmem:[#allocation7 + $0x10] sm:$0xff] %vm341, %v317
    %345 = vst.msk [vmem:[#allocation7 + $0x18] sm:$0xff] %vm341, %v318
    %346 = vst.msk [vmem:[#allocation7 + $0x20] sm:$0xff] %vm341, %v319
    %347 = vst.msk [vmem:[#allocation7 + $0x28] sm:$0xff] %vm341, %v320
    %348 = vst.msk [vmem:[#allocation7 + $0x30] sm:$0xff] %vm341, %v321
    %349 = vst.msk [vmem:[#allocation7 + $0x38] sm:$0xff] %vm341, %v322
    %350 = vst.msk [vmem:[#allocation7 + $0x40] sm:$0xff] %vm341, %v323
    %351 = vst.msk [vmem:[#allocation7 + $0x48] sm:$0xff] %vm341, %v324
    %352 = vst.msk [vmem:[#allocation7 + $0x50] sm:$0xff] %vm341, %v325
    %353 = vst.msk [vmem:[#allocation7 + $0x58] sm:$0xff] %vm341, %v326
    %354 = vst.msk [vmem:[#allocation7 + $0x60] sm:$0xff] %vm341, %v327
    %355 = vst.msk [vmem:[#allocation7 + $0x68] sm:$0xff] %vm341, %v328
    %356 = vst.msk [vmem:[#allocation7 + $0x70] sm:$0xff] %vm341, %v329
    %357 = vst.msk [vmem:[#allocation7 + $0x78] sm:$0xff] %vm341, %v330
    %358 = vst.msk [vmem:[#allocation7 + $0x80] sm:$0xff] %vm341, %v331
    %359 = vst.msk [vmem:[#allocation7 + $0x88] sm:$0xff] %vm341, %v332
    %360 = vst.msk [vmem:[#allocation7 + $0x90] sm:$0xff] %vm341, %v333
    %361 = vst.msk [vmem:[#allocation7 + $0x98] sm:$0xff] %vm341, %v334
    %362 = vst.msk [vmem:[#allocation7 + $0xa0] sm:$0xff] %vm341, %v335
    %363 = vst.msk [vmem:[#allocation7 + $0xa8] sm:$0xff] %vm341, %v336
    %364 = vst.msk [vmem:[#allocation7 + $0xb0] sm:$0xff] %vm341, %v337
    %365 = vst.msk [vmem:[#allocation7 + $0xb8] sm:$0xff] %vm341, %v338
    %366 = vst.msk [vmem:[#allocation7 + $0xc0] sm:$0xff] %vm341, %v339
    %367 = vst.msk [vmem:[#allocation7 + $0xc8] sm:$0xff] %vm341, %v340
    // Predicated region
    $region26: #{tpu_custom_call.1} parent=1 // pred_check
      _
    $region27: #{tpu_custom_call.1} parent=1 // pred_check_branch
      %369 = sbr.rel (0) target = $region29
    $region28: #{tpu_custom_call.1} parent=1 // pred_region
      // Predicated region
      $region30: #{tpu_custom_call.1} parent=28 // pred_check
        _
      $region31: #{tpu_custom_call.1} parent=28 // pred_check_branch
        %371 = sbr.rel (0) target = $region33
      $region32: #{tpu_custom_call.1} parent=28 // pred_region
        // Predicated region
        $region34: #{tpu_custom_call.1} parent=32 // pred_check
          _
        $region35: #{tpu_custom_call.1} parent=32 // pred_check_branch
          %373 = sbr.rel (0) target = $region37
        $region36: #{tpu_custom_call.1} parent=32 // pred_region
          // Predicated region
          $region49: #{tpu_custom_call.1} parent=36 // pred_check
            _
          $region50: #{tpu_custom_call.1} parent=36 // pred_check_branch
            %437 = sbr.rel (0) target = $region52
          $region51: #{tpu_custom_call.1} parent=36 // pred_region
            loop: start=0, step=1, limit=1
            $region53: #{tpu_custom_call.1} parent=51 // loop_pre_header
              _
            $region54: #{tpu_custom_call.1} parent=51 // loop_header
              %s439 = sphi 0, %s443
              %p440 = scmp.ge.s32.totalorder %s439, 1
              %s444 = sphi [#allocation7], [#allocation7]
              %s445 = sphi %s3, %s3
            $region55: #{tpu_custom_call.1} parent=51 // loop_header_branch
              %442 = sbr.rel (%p440) target = $region59
            $region56: #{tpu_custom_call.1} parent=51 // loop_body
              %v446 = vld [vmem:[%s444] sm:$0xff]
              %447 = vst [vmem:[%s445] sm:$0xff] %v446
              %v448 = vld [vmem:[%s444 + $0x8] sm:$0xff]
              %449 = vst [vmem:[%s445 + $0x8] sm:$0xff] %v448
              %v450 = vld [vmem:[%s444 + $0x10] sm:$0xff]
              %451 = vst [vmem:[%s445 + $0x10] sm:$0xff] %v450
              %v452 = vld [vmem:[%s444 + $0x18] sm:$0xff]
              %453 = vst [vmem:[%s445 + $0x18] sm:$0xff] %v452
              %v454 = vld [vmem:[%s444 + $0x20] sm:$0xff]
              %455 = vst [vmem:[%s445 + $0x20] sm:$0xff] %v454
              %v456 = vld [vmem:[%s444 + $0x28] sm:$0xff]
              %457 = vst [vmem:[%s445 + $0x28] sm:$0xff] %v456
              %v458 = vld [vmem:[%s444 + $0x30] sm:$0xff]
              %459 = vst [vmem:[%s445 + $0x30] sm:$0xff] %v458
              %v460 = vld [vmem:[%s444 + $0x38] sm:$0xff]
              %461 = vst [vmem:[%s445 + $0x38] sm:$0xff] %v460
              %v462 = vld [vmem:[%s444 + $0x40] sm:$0xff]
              %463 = vst [vmem:[%s445 + $0x40] sm:$0xff] %v462
              %v464 = vld [vmem:[%s444 + $0x48] sm:$0xff]
              %465 = vst [vmem:[%s445 + $0x48] sm:$0xff] %v464
              %v466 = vld [vmem:[%s444 + $0x50] sm:$0xff]
              %467 = vst [vmem:[%s445 + $0x50] sm:$0xff] %v466
              %v468 = vld [vmem:[%s444 + $0x58] sm:$0xff]
              %469 = vst [vmem:[%s445 + $0x58] sm:$0xff] %v468
              %v470 = vld [vmem:[%s444 + $0x60] sm:$0xff]
              %471 = vst [vmem:[%s445 + $0x60] sm:$0xff] %v470
              %v472 = vld [vmem:[%s444 + $0x68] sm:$0xff]
              %473 = vst [vmem:[%s445 + $0x68] sm:$0xff] %v472
              %v474 = vld [vmem:[%s444 + $0x70] sm:$0xff]
              %475 = vst [vmem:[%s445 + $0x70] sm:$0xff] %v474
              %v476 = vld [vmem:[%s444 + $0x78] sm:$0xff]
              %477 = vst [vmem:[%s445 + $0x78] sm:$0xff] %v476
              %v478 = vld [vmem:[%s444 + $0x80] sm:$0xff]
              %479 = vst [vmem:[%s445 + $0x80] sm:$0xff] %v478
              %v480 = vld [vmem:[%s444 + $0x88] sm:$0xff]
              %481 = vst [vmem:[%s445 + $0x88] sm:$0xff] %v480
              %v482 = vld [vmem:[%s444 + $0x90] sm:$0xff]
              %483 = vst [vmem:[%s445 + $0x90] sm:$0xff] %v482
              %v484 = vld [vmem:[%s444 + $0x98] sm:$0xff]
              %485 = vst [vmem:[%s445 + $0x98] sm:$0xff] %v484
              %v486 = vld [vmem:[%s444 + $0xa0] sm:$0xff]
              %487 = vst [vmem:[%s445 + $0xa0] sm:$0xff] %v486
              %v488 = vld [vmem:[%s444 + $0xa8] sm:$0xff]
              %489 = vst [vmem:[%s445 + $0xa8] sm:$0xff] %v488
              %v490 = vld [vmem:[%s444 + $0xb0] sm:$0xff]
              %491 = vst [vmem:[%s445 + $0xb0] sm:$0xff] %v490
              %v492 = vld [vmem:[%s444 + $0xb8] sm:$0xff]
              %493 = vst [vmem:[%s445 + $0xb8] sm:$0xff] %v492
              %v494 = vld [vmem:[%s444 + $0xc0] sm:$0xff]
              %495 = vst [vmem:[%s445 + $0xc0] sm:$0xff] %v494
            $region57: #{tpu_custom_call.1} parent=51 // loop_footer
              %s443 = sadd.s32 1, %s439
            $region58: #{tpu_custom_call.1} parent=51 // loop_footer_branch
              %438 = sbr.rel target = $region54
            $region59: #{tpu_custom_call.1} parent=51 // loop_exit
              _
          $region52: #{tpu_custom_call.1} parent=36 // pred_fallthru
            _
          // Predicated region
          $region60: #{tpu_custom_call.1} parent=36 // pred_check
            _
          $region61: #{tpu_custom_call.1} parent=36 // pred_check_branch
            %497 = sbr.rel target = $region63
          $region62: #{tpu_custom_call.1} parent=36 // pred_region
            _
          $region63: #{tpu_custom_call.1} parent=36 // pred_fallthru
            _
        $region37: #{tpu_custom_call.1} parent=32 // pred_fallthru
          _
        // Predicated region
        $region38: #{tpu_custom_call.1} parent=32 // pred_check
          _
        $region39: #{tpu_custom_call.1} parent=32 // pred_check_branch
          %375 = sbr.rel target = $region41
        $region40: #{tpu_custom_call.1} parent=32 // pred_region
          %s377 = ssub.s32 256, 1
          loop: start=0, step=1, limit=1
          $region42: #{tpu_custom_call.1} parent=40 // loop_pre_header
            _
          $region43: #{tpu_custom_call.1} parent=40 // loop_header
            %s379 = sphi 0, %s383
            %p380 = scmp.ge.s32.totalorder %s379, 1
            %s384 = sphi [#allocation7], [#allocation7]
            %s385 = sphi %s3, %s3
          $region44: #{tpu_custom_call.1} parent=40 // loop_header_branch
            %382 = sbr.rel (%p380) target = $region48
          $region45: #{tpu_custom_call.1} parent=40 // loop_body
            %v386 = vld [vmem:[%s384] sm:%s377]
            %387 = vst [vmem:[%s385] sm:%s377] %v386
            %v388 = vld [vmem:[%s384 + $0x8] sm:%s377]
            %389 = vst [vmem:[%s385 + $0x8] sm:%s377] %v388
            %v390 = vld [vmem:[%s384 + $0x10] sm:%s377]
            %391 = vst [vmem:[%s385 + $0x10] sm:%s377] %v390
            %v392 = vld [vmem:[%s384 + $0x18] sm:%s377]
            %393 = vst [vmem:[%s385 + $0x18] sm:%s377] %v392
            %v394 = vld [vmem:[%s384 + $0x20] sm:%s377]
            %395 = vst [vmem:[%s385 + $0x20] sm:%s377] %v394
            %v396 = vld [vmem:[%s384 + $0x28] sm:%s377]
            %397 = vst [vmem:[%s385 + $0x28] sm:%s377] %v396
            %v398 = vld [vmem:[%s384 + $0x30] sm:%s377]
            %399 = vst [vmem:[%s385 + $0x30] sm:%s377] %v398
            %v400 = vld [vmem:[%s384 + $0x38] sm:%s377]
            %401 = vst [vmem:[%s385 + $0x38] sm:%s377] %v400
            %v402 = vld [vmem:[%s384 + $0x40] sm:%s377]
            %403 = vst [vmem:[%s385 + $0x40] sm:%s377] %v402
            %v404 = vld [vmem:[%s384 + $0x48] sm:%s377]
            %405 = vst [vmem:[%s385 + $0x48] sm:%s377] %v404
            %v406 = vld [vmem:[%s384 + $0x50] sm:%s377]
            %407 = vst [vmem:[%s385 + $0x50] sm:%s377] %v406
            %v408 = vld [vmem:[%s384 + $0x58] sm:%s377]
            %409 = vst [vmem:[%s385 + $0x58] sm:%s377] %v408
            %v410 = vld [vmem:[%s384 + $0x60] sm:%s377]
            %411 = vst [vmem:[%s385 + $0x60] sm:%s377] %v410
            %v412 = vld [vmem:[%s384 + $0x68] sm:%s377]
            %413 = vst [vmem:[%s385 + $0x68] sm:%s377] %v412
            %v414 = vld [vmem:[%s384 + $0x70] sm:%s377]
            %415 = vst [vmem:[%s385 + $0x70] sm:%s377] %v414
            %v416 = vld [vmem:[%s384 + $0x78] sm:%s377]
            %417 = vst [vmem:[%s385 + $0x78] sm:%s377] %v416
            %v418 = vld [vmem:[%s384 + $0x80] sm:%s377]
            %419 = vst [vmem:[%s385 + $0x80] sm:%s377] %v418
            %v420 = vld [vmem:[%s384 + $0x88] sm:%s377]
            %421 = vst [vmem:[%s385 + $0x88] sm:%s377] %v420
            %v422 = vld [vmem:[%s384 + $0x90] sm:%s377]
            %423 = vst [vmem:[%s385 + $0x90] sm:%s377] %v422
            %v424 = vld [vmem:[%s384 + $0x98] sm:%s377]
            %425 = vst [vmem:[%s385 + $0x98] sm:%s377] %v424
            %v426 = vld [vmem:[%s384 + $0xa0] sm:%s377]
            %427 = vst [vmem:[%s385 + $0xa0] sm:%s377] %v426
            %v428 = vld [vmem:[%s384 + $0xa8] sm:%s377]
            %429 = vst [vmem:[%s385 + $0xa8] sm:%s377] %v428
            %v430 = vld [vmem:[%s384 + $0xb0] sm:%s377]
            %431 = vst [vmem:[%s385 + $0xb0] sm:%s377] %v430
            %v432 = vld [vmem:[%s384 + $0xb8] sm:%s377]
            %433 = vst [vmem:[%s385 + $0xb8] sm:%s377] %v432
            %v434 = vld [vmem:[%s384 + $0xc0] sm:%s377]
            %435 = vst [vmem:[%s385 + $0xc0] sm:%s377] %v434
          $region46: #{tpu_custom_call.1} parent=40 // loop_footer
            %s383 = sadd.s32 1, %s379
          $region47: #{tpu_custom_call.1} parent=40 // loop_footer_branch
            %378 = sbr.rel target = $region43
          $region48: #{tpu_custom_call.1} parent=40 // loop_exit
            _
        $region41: #{tpu_custom_call.1} parent=32 // pred_fallthru
          _
      $region33: #{tpu_custom_call.1} parent=28 // pred_fallthru
        _
      %498 = vnop
    $region29: #{tpu_custom_call.1} parent=1 // pred_fallthru
      _
    // Predicated region
    $region64: #{tpu_custom_call.1} parent=1 // pred_check
      _
    $region65: #{tpu_custom_call.1} parent=1 // pred_check_branch
      %500 = sbr.rel (0) target = $region67
    $region66: #{tpu_custom_call.1} parent=1 // pred_region
      _
    $region67: #{tpu_custom_call.1} parent=1 // pred_fallthru
      _
    %501 = vsyncpa [#allocation3], 1
    %502 = vsyncpa [#allocation5], 1

</llo_original>
